<compile_context>
chip_gen: v7x
topology: tpu7x:2x2x1
jax: 0.10.0
libtpu: 0.0.40
codegen_flags: <defaults>
</compile_context>

<pallas_src>
import math

import jax
import jax.numpy as jnp
from jax.experimental import pallas as pl
from jax.experimental.pallas import tpu as pltpu


# --------------------------------------------------------------------------
# Small helpers (tiling / VMEM budgeting)
# --------------------------------------------------------------------------
def _ceil_to(x, m):
    return -(-x // m) * m


def _pad_bytes(shape, dtype):
    """Approximate VMEM footprint of a tile (lane pad 128, sublane pad 8*pack)."""
    it = jnp.dtype(dtype).itemsize
    s = list(shape)
    s[-1] = _ceil_to(s[-1], 128)
    if len(s) >= 2:
        s[-2] = _ceil_to(s[-2], 8 * max(1, 4 // it))
    n = 1
    for d in s:
        n *= d
    return n * it


def _vmem_cap_bytes():
    """Generation-aware budget: ~100 MiB on 128 MiB parts, ~48 MiB on v7x."""
    try:
        cap = int(pltpu.get_tpu_info().vmem_capacity_bytes)
    except Exception:
        cap = 64 * 1024 * 1024
    return int(min(cap - 16 * 1024 * 1024, 100 * 1024 * 1024))


def _pick_tile(n, target, mults):
    """Largest divisor of n <= target that is a multiple of one of `mults`."""
    if n <= target:
        return n
    for m in mults:
        t = target - target % m
        while t > 0:
            if n % t == 0:
                return t
            t -= m
    return n


def _flash_vmem_bytes(TQ, TK, H, hd, C, cdt, odt):
    est = 0
    est += 2 * _pad_bytes((H, TQ, hd), cdt)            # q block (2 pipeline bufs)
    est += 2 * 2 * _pad_bytes((H, TK, hd), cdt)        # k, v blocks
    est += 2 * _pad_bytes((TQ, C), odt)                # output block
    est += 2 * (_pad_bytes((H, hd, C), cdt) + _pad_bytes((1, C), jnp.float32))
    est += 2 * _pad_bytes((H, TQ, 1), jnp.float32)     # m, l scratch
    est += _pad_bytes((H, TQ, hd), jnp.float32)        # acc scratch
    est += 3 * _pad_bytes((H, TQ, TK), jnp.float32)    # scores / probs temporaries
    est += 2 * _pad_bytes((H, TQ, hd), jnp.float32)    # pv / o_h temporaries
    return est


def _select_flash_tiles(B, N, Nkv, H, hd, C, cdt, odt, tq, tk):
    cap = _vmem_cap_bytes()
    sub = 16 if jnp.dtype(cdt).itemsize == 2 else 8
    q_mults = (sub,)
    k_mults = (128, 64, 32, 16, 8)          # prefer lane-dense score tiles
    TQ = _pick_tile(N, tq, q_mults)
    TK = _pick_tile(Nkv, tk, k_mults)
    # v7x megacore: keep the parallel extent >= 2 so neither core idles.
    if B * (N // TQ) < 2 and N > sub:
        TQ = _pick_tile(N, max(TQ // 2, sub), q_mults)
    # Shrink TK first, then TQ, until the estimated working set fits.
    while 3 * _flash_vmem_bytes(TQ, TK, H, hd, C, cdt, odt) // 2 > cap:
        if TK > 128:
            t = _pick_tile(Nkv, TK // 2, k_mults)
            if t < TK:
                TK = t
                continue
        if TQ > sub:
            t = _pick_tile(N, TQ // 2, q_mults)
            if t < TQ:
                TQ = t
                continue
        break
    limit = int(min(max(3 * _flash_vmem_bytes(TQ, TK, H, hd, C, cdt, odt) // 2,
                        32 * 1024 * 1024), cap))
    return TQ, TK, limit


# --------------------------------------------------------------------------
# Lane-dense projection kernels (run once over the tokens, never per q-tile)
# --------------------------------------------------------------------------
def _linear_kernel(x_ref, w_ref, o_ref):
    o_ref[0] = jnp.dot(x_ref[0], w_ref[...],
                       preferred_element_type=jnp.float32).astype(o_ref.dtype)


def _kv_proj_kernel(x_ref, wk_ref, wv_ref, k_ref, v_ref):
    x = x_ref[0]
    k_ref[0] = jnp.dot(x, wk_ref[...],
                       preferred_element_type=jnp.float32).astype(k_ref.dtype)
    v_ref[0] = jnp.dot(x, wv_ref[...],
                       preferred_element_type=jnp.float32).astype(v_ref.dtype)


def _linear_proj(x, w, *, out_dtype, tile=512):
    B, S, C = x.shape
    Cout = w.shape[1]
    sub = 16 if jnp.dtype(x.dtype).itemsize == 2 else 8
    T = _pick_tile(S, tile, (sub,))
    est = (2 * _pad_bytes((T, C), x.dtype) + 2 * _pad_bytes((T, Cout), out_dtype)
           + 2 * _pad_bytes((C, Cout), w.dtype) + _pad_bytes((T, Cout), jnp.float32))
    limit = int(min(max(2 * est, 32 * 1024 * 1024), _vmem_cap_bytes()))
    grid_spec = pltpu.PrefetchScalarGridSpec(
        num_scalar_prefetch=0,
        grid=(B, S // T),
        in_specs=[pl.BlockSpec((1, T, C), lambda b, i: (b, i, 0)),
                  pl.BlockSpec((C, Cout), lambda b, i: (0, 0))],
        out_specs=pl.BlockSpec((1, T, Cout), lambda b, i: (b, i, 0)),
    )
    return pl.pallas_call(
        _linear_kernel,
        out_shape=jax.ShapeDtypeStruct((B, S, Cout), out_dtype),
        grid_spec=grid_spec,
        compiler_params=pltpu.CompilerParams(
            dimension_semantics=("parallel", "parallel"),
            vmem_limit_bytes=limit),
    )(x, w)


def _kv_proj(x_kv, wk, wv, *, out_dtype, tile=512):
    B, S, C = x_kv.shape
    sub = 16 if jnp.dtype(x_kv.dtype).itemsize == 2 else 8
    T = _pick_tile(S, tile, (sub,))
    est = (2 * _pad_bytes((T, C), x_kv.dtype)
           + 4 * _pad_bytes((T, C), out_dtype)
           + 4 * _pad_bytes((C, C), wk.dtype)
           + 2 * _pad_bytes((T, C), jnp.float32))
    limit = int(min(max(2 * est, 32 * 1024 * 1024), _vmem_cap_bytes()))
    grid_spec = pltpu.PrefetchScalarGridSpec(
        num_scalar_prefetch=0,
        grid=(B, S // T),
        in_specs=[pl.BlockSpec((1, T, C), lambda b, i: (b, i, 0)),
                  pl.BlockSpec((C, C), lambda b, i: (0, 0)),
                  pl.BlockSpec((C, C), lambda b, i: (0, 0))],
        out_specs=[pl.BlockSpec((1, T, C), lambda b, i: (b, i, 0)),
                   pl.BlockSpec((1, T, C), lambda b, i: (b, i, 0))],
    )
    return pl.pallas_call(
        _kv_proj_kernel,
        out_shape=(jax.ShapeDtypeStruct((B, S, C), out_dtype),
                   jax.ShapeDtypeStruct((B, S, C), out_dtype)),
        grid_spec=grid_spec,
        compiler_params=pltpu.CompilerParams(
            dimension_semantics=("parallel", "parallel"),
            vmem_limit_bytes=limit),
    )(x_kv, wk, wv)


# --------------------------------------------------------------------------
# Flash-attention kernel (online softmax, fused output projection + bias)
# --------------------------------------------------------------------------
def _flash_attn_kernel(q_ref, k_ref, v_ref, wp_ref, bp_ref, o_ref,
                       m_scr, l_scr, acc_scr):
    ki = pl.program_id(2)
    cdt = q_ref.dtype
    bmm_nn = (((2,), (1,)), ((0,), (0,)))   # (h,m,k) x (h,k,n) -> (h,m,n)
    bmm_nt = (((2,), (2,)), ((0,), (0,)))   # (h,m,d) x (h,n,d) -> (h,m,n)

    @pl.when(ki == 0)
    def _init():
        m_scr[...] = jnp.full(m_scr.shape, -jnp.inf, m_scr.dtype)
        l_scr[...] = jnp.zeros(l_scr.shape, l_scr.dtype)
        acc_scr[...] = jnp.zeros(acc_scr.shape, acc_scr.dtype)

    q = q_ref[0]                    # (H, TQ, hd)  (softmax scale folded in)
    k = k_ref[0]                    # (H, TK, hd)
    v = v_ref[0]                    # (H, TK, hd)

    # Scores: contract head_dim directly (no explicit transpose of k).
    s = jax.lax.dot_general(q, k, bmm_nt,
                            preferred_element_type=jnp.float32)   # (H, TQ, TK)

    # Online-softmax update; statistics/accumulator stay in f32.
    m_prev = m_scr[...]
    m_new = jnp.maximum(m_prev, jnp.max(s, axis=-1, keepdims=True))
    alpha = jnp.exp(m_prev - m_new)
    p = jnp.exp(s - m_new)
    l_scr[...] = alpha * l_scr[...] + jnp.sum(p, axis=-1, keepdims=True)
    pv = jax.lax.dot_general(p.astype(cdt), v, bmm_nn,
                             preferred_element_type=jnp.float32)  # (H, TQ, hd)
    acc_scr[...] = alpha * acc_scr[...] + pv
    m_scr[...] = m_new

    @pl.when(ki == pl.num_programs(2) - 1)
    def _finalize():
        approx = bool(jnp.dtype(cdt).itemsize == 2)   # exact recip for f32 runs
        inv_l = pl.reciprocal(l_scr[...], approx=approx)
        o_h = (acc_scr[...] * inv_l).astype(cdt)                  # (H, TQ, hd)
        # Per-head projection + reduce over heads == concat(heads) @ Wproj.
        o = jax.lax.dot_general(o_h, wp_ref[...], bmm_nn,
                                preferred_element_type=jnp.float32)  # (H, TQ, C)
        o_ref[0] = (jnp.sum(o, axis=0) + bp_ref[...]).astype(o_ref.dtype)


def _flash_attention(q, k, v, wp_h, bp, *, out_dtype, tq, tk):
    B, H, N, hd = q.shape
    Nkv = k.shape[2]
    C = wp_h.shape[2]
    cdt = q.dtype
    TQ, TK, limit = _select_flash_tiles(B, N, Nkv, H, hd, C, cdt, out_dtype,
                                        tq, tk)
    grid_spec = pltpu.PrefetchScalarGridSpec(
        num_scalar_prefetch=0,
        grid=(B, N // TQ, Nkv // TK),
        in_specs=[
            pl.BlockSpec((1, H, TQ, hd), lambda b, qi, ki: (b, 0, qi, 0)),  # q
            pl.BlockSpec((1, H, TK, hd), lambda b, qi, ki: (b, 0, ki, 0)),  # k
            pl.BlockSpec((1, H, TK, hd), lambda b, qi, ki: (b, 0, ki, 0)),  # v
            pl.BlockSpec((H, hd, C), lambda b, qi, ki: (0, 0, 0)),          # wproj
            pl.BlockSpec((1, C), lambda b, qi, ki: (0, 0)),                 # bproj
        ],
        out_specs=pl.BlockSpec((1, TQ, C), lambda b, qi, ki: (b, qi, 0)),
        scratch_shapes=[
            pltpu.VMEM((H, TQ, 1), jnp.float32),   # running max
            pltpu.VMEM((H, TQ, 1), jnp.float32),   # running sum
            pltpu.VMEM((H, TQ, hd), jnp.float32),  # output accumulator
        ],
    )
    return pl.pallas_call(
        _flash_attn_kernel,
        out_shape=jax.ShapeDtypeStruct((B, N, C), out_dtype),
        grid_spec=grid_spec,
        compiler_params=pltpu.CompilerParams(
            dimension_semantics=("parallel", "parallel", "arbitrary"),
            vmem_limit_bytes=limit),
    )(q, k, v, wp_h, bp)


# --------------------------------------------------------------------------
# Module glue (parameters, spatial reduction, forward)
# --------------------------------------------------------------------------
def init_params(key, dim, num_heads, sr_ratio):
    ks = jax.random.split(key, 8)
    s = 1.0 / math.sqrt(dim)
    params = {
        "wq": jax.random.uniform(ks[0], (dim, dim), jnp.float32, -s, s),
        "wkv": jax.random.uniform(ks[1], (dim, 2 * dim), jnp.float32, -s, s),
        "wproj": jax.random.uniform(ks[2], (dim, dim), jnp.float32, -s, s),
        "bproj": jax.random.uniform(ks[3], (dim,), jnp.float32, -s, s),
    }
    if sr_ratio > 1:
        fan = dim * sr_ratio * sr_ratio
        c = 1.0 / math.sqrt(fan)
        params["w_sr"] = jax.random.uniform(
            ks[4], (dim, dim, sr_ratio, sr_ratio), jnp.float32, -c, c)
        params["b_sr"] = jax.random.uniform(ks[5], (dim,), jnp.float32, -c, c)
        params["ln_gamma"] = jnp.ones((dim,), jnp.float32)
        params["ln_beta"] = jnp.zeros((dim,), jnp.float32)
    return params


def _spatial_reduce(x, H, W, params, sr):
    """torch: permute->reshape(B,C,H,W) -> Conv2d(k=s=sr) -> flatten -> LayerNorm."""
    B, N, C = x.shape
    Hs, Ws = H // sr, W // sr
    x_nchw = jnp.transpose(x, (0, 2, 1)).reshape(B, C, H, W)
    patches = x_nchw.reshape(B, C, Hs, sr, Ws, sr)
    patches = jnp.transpose(patches, (0, 2, 4, 1, 3, 5)).reshape(
        B, Hs * Ws, C * sr * sr)
    w = params["w_sr"].reshape(C, C * sr * sr)
    xk = patches @ w.T + params["b_sr"]
    mu = jnp.mean(xk, axis=-1, keepdims=True)
    var = jnp.mean((xk - mu) ** 2, axis=-1, keepdims=True)
    xk = (xk - mu) / jnp.sqrt(var + 1e-5)
    return xk * params["ln_gamma"] + params["ln_beta"]


def attention_forward(x, H, W, params, num_heads, sr_ratio, *,
                      compute_dtype=jnp.bfloat16, tq=512, tk=512):
    B, N, C = x.shape
    assert C % num_heads == 0
    hd = C // num_heads
    scale = hd ** (-0.5)
    cdt = compute_dtype

    x_kv = _spatial_reduce(x, H, W, params, sr_ratio) if sr_ratio > 1 else x

    # Lane-dense projection kernels; softmax scale folded into wq (free).
    wq = (params["wq"] * scale).astype(cdt)
    wk = params["wkv"][:, :C].astype(cdt)
    wv = params["wkv"][:, C:].astype(cdt)
    q = _linear_proj(x.astype(cdt), wq, out_dtype=cdt)
    k, v = _kv_proj(x_kv.astype(cdt), wk, wv, out_dtype=cdt)

    # Head split: one XLA layout op per tensor (no in-kernel relayouts).
    def split_heads(t):
        Bt, St, Ct = t.shape
        return t.reshape(Bt, St, num_heads, hd).transpose(0, 2, 1, 3)

    q_h, k_h, v_h = split_heads(q), split_heads(k), split_heads(v)

    wp_h = params["wproj"].reshape(num_heads, hd, C).astype(cdt)
    bp = params["bproj"].reshape(1, C).astype(jnp.float32)

    # TODO(synk): attn_drop / proj_drop are identity in eval mode; not modeled.
    return _flash_attention(q_h, k_h, v_h, wp_h, bp,
                            out_dtype=x.dtype, tq=tq, tk=tk)


# ---------------- pure-JAX reference (mirrors the torch forward) -------------
def reference_forward(x, H, W, params, num_heads, sr_ratio):
    B, N, C = x.shape
    hd = C // num_heads
    scale = hd ** (-0.5)
    q = (x @ params["wq"]).reshape(B, N, num_heads, hd).transpose(0, 2, 1, 3)
    x_kv = _spatial_reduce(x, H, W, params, sr_ratio) if sr_ratio > 1 else x
    kv = (x_kv @ params["wkv"]).reshape(
        B, -1, 2, num_heads, hd).transpose(2, 0, 3, 1, 4)
    k, v = kv[0], kv[1]
    attn = (q @ jnp.swapaxes(k, -2, -1)) * scale
    attn = jax.nn.softmax(attn, axis=-1)
    out = (attn @ v).transpose(0, 2, 1, 3).reshape(B, N, C)
    return out @ params["wproj"] + params["bproj"]


if __name__ == "__main__":
    key = jax.random.PRNGKey(0)
    B, Himg, Wimg = 2, 16, 16
    N = Himg * Wimg

    configs = [
        # f32 compute, multi-tile query + multi-step online softmax
        dict(dim=64, num_heads=8, sr=1, cdt=jnp.float32,
             tq=128, tk=128, atol=5e-3, rtol=5e-3),
        # bf16 compute, single big tile
        dict(dim=64, num_heads=8, sr=1, cdt=jnp.bfloat16,
             tq=256, tk=256, atol=1e-2, rtol=2e-2),
        # bf16 compute, realistic head_dim, spatial-reduction (sr=2) path
        dict(dim=128, num_heads=2, sr=2, cdt=jnp.bfloat16,
             tq=128, tk=64, atol=1e-2, rtol=2e-2),
    ]

    ok = True
    for i, cfg in enumerate(configs):
        kx, kp = jax.random.split(jax.random.fold_in(key, i))
        x = jax.random.normal(kx, (B, N, cfg["dim"]), jnp.float32)
        params = init_params(kp, cfg["dim"], cfg["num_heads"], cfg["sr"])
        out = attention_forward(
            x, Himg, Wimg, params, cfg["num_heads"], cfg["sr"],
            compute_dtype=cfg["cdt"], tq=cfg["tq"], tk=cfg["tk"])
        out = jax.block_until_ready(out)
        ref = reference_forward(x, Himg, Wimg, params,
                                cfg["num_heads"], cfg["sr"])
        ok = ok and bool(jnp.allclose(out, ref,
                                      atol=cfg["atol"], rtol=cfg["rtol"]))

    print("KERNEL_OK" if ok else "MISMATCH")
</pallas_src>

<mosaic_0001>
module attributes {stable_mosaic.version = 11 : i64} {
  func.func @_linear_kernel(%arg0: i32, %arg1: i32, %arg2: memref<1x256x64xf32, #tpu.memory_space<vmem>>, %arg3: memref<64x64xf32, #tpu.memory_space<vmem>>, %arg4: memref<1x256x64xf32, #tpu.memory_space<vmem>>) attributes {dimension_semantics = [#tpu.dimension_semantics<parallel>, #tpu.dimension_semantics<parallel>], iteration_bounds = array<i64: 2, 1>, scalar_prefetch = 0 : i64, scratch_operands = 0 : i64, tpu.core_type = #tpu.core_type<tc>, window_params = [{transform_indices = @transform_0, window_bounds = array<i64: 1, 256, 64>}, {pipeline_mode = #tpu.pipeline_mode<synchronous>, transform_indices = @transform_1, window_bounds = array<i64: 64, 64>}, {transform_indices = @transform_2, window_bounds = array<i64: 1, 256, 64>}]} {
    %c0 = arith.constant 0 : index
    %c0_0 = arith.constant 0 : index
    %c0_1 = arith.constant 0 : index
    %0 = vector.load %arg2[%c0, %c0_0, %c0_1] : memref<1x256x64xf32, #tpu.memory_space<vmem>>, vector<1x256x64xf32>
    %1 = vector.shape_cast %0 : vector<1x256x64xf32> to vector<256x64xf32>
    %c0_2 = arith.constant 0 : index
    %c0_3 = arith.constant 0 : index
    %2 = vector.load %arg3[%c0_2, %c0_3] : memref<64x64xf32, #tpu.memory_space<vmem>>, vector<64x64xf32>
    %cst = arith.constant dense<0.000000e+00> : vector<256x64xf32>
    %3 = tpu.matmul %1, %2, %cst {dimension_numbers = #tpu.dot_dimension_numbers<[1], [0], [0], [1], [0, 0, 1, 1], [], []>} : vector<256x64xf32>, vector<64x64xf32>, vector<256x64xf32> -> vector<256x64xf32>
    %c0_4 = arith.constant 0 : index
    %c0_5 = arith.constant 0 : index
    %c0_6 = arith.constant 0 : index
    %4 = vector.load %arg4[%c0_4, %c0_5, %c0_6] : memref<1x256x64xf32, #tpu.memory_space<vmem>>, vector<1x256x64xf32>
    %5 = vector.shape_cast %4 : vector<1x256x64xf32> to vector<256x64xf32>
    %6 = vector.shape_cast %3 : vector<256x64xf32> to vector<1x256x64xf32>
    tpu.vector_store %arg4[%c0_4, %c0_5, %c0_6], %6 {strides = array<i32>} : memref<1x256x64xf32, #tpu.memory_space<vmem>>, vector<1x256x64xf32>,
    return
  }
  func.func @transform_0(%arg0: i32, %arg1: i32) -> (i32, i32, i32) {
    %c0_i32 = arith.constant 0 : i32
    %c0_i32_0 = arith.constant 0 : i32
    return %arg0, %arg1, %c0_i32 : i32, i32, i32
  }
  func.func @transform_1(%arg0: i32, %arg1: i32) -> (i32, i32) {
    %c0_i32 = arith.constant 0 : i32
    %c0_i32_0 = arith.constant 0 : i32
    %c0_i32_1 = arith.constant 0 : i32
    return %c0_i32, %c0_i32_0 : i32, i32
  }
  func.func @transform_2(%arg0: i32, %arg1: i32) -> (i32, i32, i32) {
    %c0_i32 = arith.constant 0 : i32
    %c0_i32_0 = arith.constant 0 : i32
    return %arg0, %arg1, %c0_i32 : i32, i32, i32
  }
}

</mosaic_0001>

<llo_original>
// kernel: tpu_custom_call.1
$region0: #{tpu_custom_call.1}
  #allocation0 [shape = 'u32[]', space=smem, size = 0x4, offset = 0x4, fixed_abs, tag = 'smem constant byte address 0x4 - core index']
  #allocation1 [shape = 'u32[144,128]{1,0:T(1,128)}', space=vmem, size = 0x12000, scoped, tag = 'internal scratch']
  %s0 = inlined_call_operand.vmem [shape: f32[2,256,64], index: 0, kind: input, shape index: {}]
  %s1 = inlined_call_operand.vmem [shape: f32[64,64], index: 1, kind: input, shape index: {}]
  %s2 = inlined_call_operand.vmem [shape: f32[2,256,64], index: 2, kind: output, shape index: {}]
  %s3 = sld [smem:[#allocation0]]
  $region41: #{tpu_custom_call.1} parent=0
    _
  %s5 = ssub.s32 1, %s3
  %s6 = scalar_select 0, %s5, %s3
  loop: start=0, step=1, limit=4
  $region2: #{tpu_custom_call.1} parent=0 // loop_pre_header
    _
  $region3: #{tpu_custom_call.1} parent=0 // loop_header
    %s8 = sphi 0, %s12
    %p9 = scmp.ge.s32.totalorder %s8, 4
    %s15 = sphi 0, %s27
    %s16 = sphi 0, %s23
    %s17 = sphi 0, %s15
    %s18 = sphi 0, %s16
    %s19 = sphi 0, %s17
    %s20 = sphi 0, %s18
    %s32 = sphi 0, %s34
    %s35 = sphi 0, %s32
    %s36 = sphi 0, %s35
    %s52 = sphi 0, %s36
    %s56 = sphi 0, %s56
    %s58 = sphi 0, %s56
    %s59 = sphi 0, %s58
    %s73 = sphi 0, %s59
    %s81 = sphi 0, %s83
    %s84 = sphi 0, %s81
    %s85 = sphi 0, %s84
    %s101 = sphi 0, %s85
  $region4: #{tpu_custom_call.1} parent=0 // loop_header_branch
    %11 = sbr.rel (%p9) target = $region8
  $region5: #{tpu_custom_call.1} parent=0 // loop_body
    %s13 = ssub.s32 %s8, 1
    %s14 = ssub.s32 %s8, 2
    %s21 = sadd.s32 1, %s16
    %p22 = scmp.ge.s32.totalorder %s21, 1
    %s23 = scalar_select %p22, 0, %s21
    %s24 = sadd.s32 1, %s15
    %s25 = scalar_select %p22, %s24, %s15
    %p26 = scmp.ge.s32.totalorder %s25, 2
    %s27 = scalar_select %p26, 0, %s25
    %s28 = ssub.s32 %s15, %s27
    %s29 = ssub.s32 %s16, %s23
    %s30 = sor.u32 %s28, %s29
    %p31 = scmp.eq.s32.totalorder %s30, 0
    %s33 = sadd.s32 %s32, 1
    %s34 = scalar_select %p31, %s32, %s33
    %p37 = pneg %p31
    %p38 = scmp.eq.s32.totalorder %s8, 1
    %p39 = por %p37, %p38
    %p40 = scmp.ne.s32.totalorder %s32, %s35
    %p41 = scmp.eq.s32.totalorder %s8, 0
    %p42 = por %p40, %p41
    %p43 = scmp.ne.s32.totalorder %s32, %s35
    %p44 = scmp.eq.s32.totalorder %s13, 1
    %p45 = por %p43, %p44
    %p46 = scmp.ne.s32.totalorder %s35, %s36
    %p47 = scmp.eq.s32.totalorder %s13, 0
    %p48 = por %p46, %p47
    %p49 = scmp.ne.s32.totalorder %s35, %s36
    %p50 = scmp.eq.s32.totalorder %s14, 1
    %p51 = por %p49, %p50
    %p53 = scmp.ne.s32.totalorder %s36, %s52
    %p54 = scmp.eq.s32.totalorder %s14, 0
    %p55 = por %p53, %p54
    %s57 = sadd.s32 %s56, 1
    %p60 = scmp.eq.s32.totalorder %s8, 1
    %p61 = scmp.ne.s32.totalorder %s56, %s58
    %p62 = scmp.eq.s32.totalorder %s8, 0
    %p63 = por %p61, %p62
    %p64 = scmp.ne.s32.totalorder %s56, %s58
    %p65 = scmp.eq.s32.totalorder %s13, 1
    %p66 = por %p64, %p65
    %p67 = scmp.ne.s32.totalorder %s58, %s59
    %p68 = scmp.eq.s32.totalorder %s13, 0
    %p69 = por %p67, %p68
    %p70 = scmp.ne.s32.totalorder %s58, %s59
    %p71 = scmp.eq.s32.totalorder %s14, 1
    %p72 = por %p70, %p71
    %p74 = scmp.ne.s32.totalorder %s59, %s73
    %p75 = scmp.eq.s32.totalorder %s14, 0
    %p76 = por %p74, %p75
    %s77 = ssub.s32 %s15, %s27
    %s78 = ssub.s32 %s16, %s23
    %s79 = sor.u32 %s77, %s78
    %p80 = scmp.eq.s32.totalorder %s79, 0
    %s82 = sadd.s32 %s81, 1
    %s83 = scalar_select %p80, %s81, %s82
    %p86 = pneg %p80
    %p87 = scmp.eq.s32.totalorder %s8, 1
    %p88 = por %p86, %p87
    %p89 = scmp.ne.s32.totalorder %s81, %s84
    %p90 = scmp.eq.s32.totalorder %s8, 0
    %p91 = por %p89, %p90
    %p92 = scmp.ne.s32.totalorder %s81, %s84
    %p93 = scmp.eq.s32.totalorder %s13, 1
    %p94 = por %p92, %p93
    %p95 = scmp.ne.s32.totalorder %s84, %s85
    %p96 = scmp.eq.s32.totalorder %s13, 0
    %p97 = por %p95, %p96
    %p98 = scmp.ne.s32.totalorder %s84, %s85
    %p99 = scmp.eq.s32.totalorder %s14, 1
    %p100 = por %p98, %p99
    %p102 = scmp.ne.s32.totalorder %s85, %s101
    %p103 = scmp.eq.s32.totalorder %s14, 0
    %p104 = por %p102, %p103
    %p105 = scmp.le.s32.totalorder 1, %s8
    %p106 = scmp.lt.s32.totalorder %s8, 3
    %p107 = pnand %p105, %p106
    %p108 = pneg %p107
    // Predicated region
    $region9: #{tpu_custom_call.1} parent=5 // pred_check
      _
    $region10: #{tpu_custom_call.1} parent=5 // pred_check_branch
      %110 = sbr.rel (%p107) target = $region12
    $region11: #{tpu_custom_call.1} parent=5 // pred_region
      %s111 = ssub.s32 %s8, 1
      // Predicated region
      $region13: #{tpu_custom_call.1} parent=11 // pred_check
        %p112 = pneg %p69
      $region14: #{tpu_custom_call.1} parent=11 // pred_check_branch
        %114 = sbr.rel (%p112) target = $region16
      $region15: #{tpu_custom_call.1} parent=11 // pred_region
        _
      $region16: #{tpu_custom_call.1} parent=11 // pred_fallthru
        _
    $region12: #{tpu_custom_call.1} parent=5 // pred_fallthru
      _
    %p115 = scmp.lt.s32.totalorder %s8, 2
    // Predicated region
    $region17: #{tpu_custom_call.1} parent=5 // pred_check
      %p116 = pneg %p115
    $region18: #{tpu_custom_call.1} parent=5 // pred_check_branch
      %118 = sbr.rel (%p116) target = $region20
    $region19: #{tpu_custom_call.1} parent=5 // pred_region
      // Predicated region
      $region21: #{tpu_custom_call.1} parent=19 // pred_check
        %p119 = pneg %p42
      $region22: #{tpu_custom_call.1} parent=19 // pred_check_branch
        %121 = sbr.rel (%p119) target = $region24
      $region23: #{tpu_custom_call.1} parent=19 // pred_region
        %s122 = smul.u32 32, %s16
        %p123 = scmp.lt.s32.totalorder %s15, 1
        %s124 = scalar_select %p123, %s15, 1
        %p125 = scmp.lt.s32.totalorder %s122, 31
        %s126 = scalar_select %p125, %s122, 31
        %s127 = smul.addr %s124, 32
        %s128 = sadd.s32 %s126, %s127
        %s129 = smul.addr %s128, 8
        %s130 = scalar_lea.vmem %s0, %s129
        %s131 = smul.u32 32, %s16
      $region24: #{tpu_custom_call.1} parent=19 // pred_fallthru
        _
    $region20: #{tpu_custom_call.1} parent=5 // pred_fallthru
      _
    %p132 = scmp.le.s32.totalorder 1, %s8
    %p133 = scmp.lt.s32.totalorder %s8, 3
    %p134 = pnand %p132, %p133
    %p135 = pneg %p134
    // Predicated region
    $region25: #{tpu_custom_call.1} parent=5 // pred_check
      _
    $region26: #{tpu_custom_call.1} parent=5 // pred_check_branch
      %137 = sbr.rel (%p134) target = $region28
    $region27: #{tpu_custom_call.1} parent=5 // pred_region
      %s138 = ssub.s32 %s8, 1
      %s139 = smul.u32 32, %s18
      %p140 = scmp.lt.s32.totalorder %s17, 1
      %s141 = scalar_select %p140, %s17, 1
      %p142 = scmp.lt.s32.totalorder %s139, 31
      %s143 = scalar_select %p142, %s139, 31
      %s144 = smul.addr %s141, 32
      %s145 = sadd.s32 %s143, %s144
      %s146 = smul.addr %s145, 8
      %s147 = scalar_lea.vmem %s0, %s146
      %p148 = pneg %p48
      %p149 = pneg %p45
      %p150 = pneg %p69
      %p151 = pneg %p66
      %p152 = pneg %p97
      %p153 = pneg %p94
      %s154 = smul.u32 32, %s18
      %p155 = scmp.lt.s32.totalorder %s17, 1
      %s156 = scalar_select %p155, %s17, 1
      %p157 = scmp.lt.s32.totalorder %s154, 31
      %s158 = scalar_select %p157, %s154, 31
      %s159 = smul.addr %s156, 32
      %s160 = sadd.s32 %s158, %s159
      %s161 = smul.addr %s160, 8
      %s162 = scalar_lea.vmem %s2, %s161
      %s163 = smul.u32 32, %s18
      %p164 = scmp.lt.s32.totalorder %s17, 1
      %s165 = scalar_select %p164, %s17, 1
      %p166 = scmp.lt.s32.totalorder %s163, 31
      %s167 = scalar_select %p166, %s163, 31
      %s168 = smul.addr %s165, 32
      %s169 = sadd.s32 %s167, %s168
      %s170 = smul.addr %s169, 8
      %s171 = scalar_lea.vmem %s0, %s170
      %s172 = smul.u32 32, %s18
      %s173 = smul.u32 32, %s18
      %p174 = scmp.lt.s32.totalorder %s17, 1
      %s175 = scalar_select %p174, %s17, 1
      %p176 = scmp.lt.s32.totalorder %s173, 31
      %s177 = scalar_select %p176, %s173, 31
      %s178 = smul.addr %s175, 32
      %s179 = sadd.s32 %s177, %s178
      %s180 = smul.addr %s179, 8
      %s181 = scalar_lea.vmem %s2, %s180
      %s182 = smul.u32 32, %s18
      %v183 = vld [vmem:[%s171] sm:$0xff]
      %v184 = vld [vmem:[%s171 + $0x8] sm:$0xff]
      %v185 = vld [vmem:[%s171 + $0x10] sm:$0xff]
      %v186 = vld [vmem:[%s171 + $0x18] sm:$0xff]
      %v187 = vld [vmem:[%s171 + $0x20] sm:$0xff]
      %v188 = vld [vmem:[%s171 + $0x28] sm:$0xff]
      %v189 = vld [vmem:[%s171 + $0x30] sm:$0xff]
      %v190 = vld [vmem:[%s171 + $0x38] sm:$0xff]
      %v191 = vld [vmem:[%s171 + $0x40] sm:$0xff]
      %v192 = vld [vmem:[%s171 + $0x48] sm:$0xff]
      %v193 = vld [vmem:[%s171 + $0x50] sm:$0xff]
      %v194 = vld [vmem:[%s171 + $0x58] sm:$0xff]
      %v195 = vld [vmem:[%s171 + $0x60] sm:$0xff]
      %v196 = vld [vmem:[%s171 + $0x68] sm:$0xff]
      %v197 = vld [vmem:[%s171 + $0x70] sm:$0xff]
      %v198 = vld [vmem:[%s171 + $0x78] sm:$0xff]
      %v199 = vld [vmem:[%s171 + $0x80] sm:$0xff]
      %v200 = vld [vmem:[%s171 + $0x88] sm:$0xff]
      %v201 = vld [vmem:[%s171 + $0x90] sm:$0xff]
      %v202 = vld [vmem:[%s171 + $0x98] sm:$0xff]
      %v203 = vld [vmem:[%s171 + $0xa0] sm:$0xff]
      %v204 = vld [vmem:[%s171 + $0xa8] sm:$0xff]
      %v205 = vld [vmem:[%s171 + $0xb0] sm:$0xff]
      %v206 = vld [vmem:[%s171 + $0xb8] sm:$0xff]
      %v207 = vld [vmem:[%s171 + $0xc0] sm:$0xff]
      %v208 = vld [vmem:[%s171 + $0xc8] sm:$0xff]
      %v209 = vld [vmem:[%s171 + $0xd0] sm:$0xff]
      %v210 = vld [vmem:[%s171 + $0xd8] sm:$0xff]
      %v211 = vld [vmem:[%s171 + $0xe0] sm:$0xff]
      %v212 = vld [vmem:[%s171 + $0xe8] sm:$0xff]
      %v213 = vld [vmem:[%s171 + $0xf0] sm:$0xff]
      %v214 = vld [vmem:[%s171 + $0xf8] sm:$0xff]
      %v215 = vld [vmem:[%s1] sm:$0xff]
      %v216 = vld [vmem:[%s1 + $0x8] sm:$0xff]
      %v217 = vld [vmem:[%s1 + $0x10] sm:$0xff]
      %v218 = vld [vmem:[%s1 + $0x18] sm:$0xff]
      %v219 = vld [vmem:[%s1 + $0x20] sm:$0xff]
      %v220 = vld [vmem:[%s1 + $0x28] sm:$0xff]
      %v221 = vld [vmem:[%s1 + $0x30] sm:$0xff]
      %v222 = vld [vmem:[%s1 + $0x38] sm:$0xff]
      %vm223 = vcmask 523264
      %v225 = vsel %vm223, %v183, 0
      %v228 = vsel %vm223, %v184, 0
      %v231 = vsel %vm223, %v185, 0
      %v234 = vsel %vm223, %v186, 0
      %v237 = vsel %vm223, %v187, 0
      %v240 = vsel %vm223, %v188, 0
      %v243 = vsel %vm223, %v189, 0
      %v246 = vsel %vm223, %v190, 0
      %v249 = vsel %vm223, %v191, 0
      %v252 = vsel %vm223, %v192, 0
      %v255 = vsel %vm223, %v193, 0
      %v258 = vsel %vm223, %v194, 0
      %v261 = vsel %vm223, %v195, 0
      %v264 = vsel %vm223, %v196, 0
      %v267 = vsel %vm223, %v197, 0
      %v270 = vsel %vm223, %v198, 0
      %v273 = vsel %vm223, %v199, 0
      %v276 = vsel %vm223, %v200, 0
      %v279 = vsel %vm223, %v201, 0
      %v282 = vsel %vm223, %v202, 0
      %v285 = vsel %vm223, %v203, 0
      %v288 = vsel %vm223, %v204, 0
      %v291 = vsel %vm223, %v205, 0
      %v294 = vsel %vm223, %v206, 0
      %v297 = vsel %vm223, %v207, 0
      %v300 = vsel %vm223, %v208, 0
      %v303 = vsel %vm223, %v209, 0
      %v306 = vsel %vm223, %v210, 0
      %v309 = vsel %vm223, %v211, 0
      %v312 = vsel %vm223, %v212, 0
      %v315 = vsel %vm223, %v213, 0
      %v318 = vsel %vm223, %v214, 0
      %320 = vmatprep.subr.mxu0 0.0
      %321 = vmatpush1.msra.mxu0 %v215
      %322 = vmatprep.subr.mxu0 0.0
      %323 = vmatpush1.msra.mxu0 %v216
      %324 = vmatprep.subr.mxu0 0.0
      %325 = vmatpush1.msra.mxu0 %v217
      %326 = vmatprep.subr.mxu0 0.0
      %327 = vmatpush1.msra.mxu0 %v218
      %328 = vmatprep.subr.mxu0 0.0
      %329 = vmatpush1.msra.mxu0 %v219
      %330 = vmatprep.subr.mxu0 0.0
      %331 = vmatpush1.msra.mxu0 %v220
      %332 = vmatprep.subr.mxu0 0.0
      %333 = vmatpush1.msra.mxu0 %v221
      %334 = vmatprep.subr.mxu0 0.0
      %335 = vmatpush1.msra.mxu0 %v222
      %336 = vmatprep.subr.mxu0 0.0
      %337 = vmatpush1.msra.mxu0 0.0
      %338 = vmatprep.subr.mxu0 0.0
      %339 = vmatpush1.msra.mxu0 0.0
      %340 = vmatprep.subr.mxu0 0.0
      %341 = vmatpush1.msra.mxu0 0.0
      %342 = vmatprep.subr.mxu0 0.0
      %343 = vmatpush1.msra.mxu0 0.0
      %344 = vmatprep.subr.mxu0 0.0
      %345 = vmatpush1.msra.mxu0 0.0
      %346 = vmatprep.subr.mxu0 0.0
      %347 = vmatpush1.msra.mxu0 0.0
      %348 = vmatprep.subr.mxu0 0.0
      %349 = vmatpush1.msra.mxu0 0.0
      %350 = vmatprep.subr.mxu0 0.0
      %351 = vmatpush1.msra.mxu0 0.0
      %352 = vmatprep.subr.mxu0 0.0
      %353 = vmatpush1.msra.mxu0 0.0
      %354 = vmatprep.subr.mxu0 0.0
      %355 = vmatpush1.msra.mxu0 0.0
      %356 = vmatprep.subr.mxu0 0.0
      %357 = vmatpush1.msra.mxu0 0.0
      %358 = vmatprep.subr.mxu0 0.0
      %359 = vmatpush1.msra.mxu0 0.0
      %360 = vmatprep.subr.mxu0 0.0
      %361 = vmatpush1.msra.mxu0 0.0
      %362 = vmatprep.subr.mxu0 0.0
      %363 = vmatpush1.msra.mxu0 0.0
      %364 = vmatprep.subr.mxu0 0.0
      %365 = vmatpush1.msra.mxu0 0.0
      %366 = vmatprep.subr.mxu0 0.0
      %367 = vmatpush1.msra.mxu0 0.0
      %368 = vmatprep.subr.mxu0 0.0
      %369 = vmatpush1.msra.mxu0 0.0
      %370 = vmatprep.subr.mxu0 0.0
      %371 = vmatpush1.msra.mxu0 0.0
      %372 = vmatprep.subr.mxu0 0.0
      %373 = vmatpush1.msra.mxu0 0.0
      %374 = vmatprep.subr.mxu0 0.0
      %375 = vmatpush1.msra.mxu0 0.0
      %376 = vmatprep.subr.mxu0 0.0
      %377 = vmatpush1.msra.mxu0 0.0
      %378 = vmatprep.subr.mxu0 0.0
      %379 = vmatpush1.msra.mxu0 0.0
      %380 = vmatprep.subr.mxu0 0.0
      %381 = vmatpush1.msra.mxu0 0.0
      %382 = vmatprep.subr.mxu0 0.0
      %383 = vmatpush1.msra.mxu0 0.0
      %384 = vmatprep.mubr.f32.mxu0 0.0
      %385 = vmatmul.mubr.f32.gmra.mrb[0].mxu0 %v225
      %v386 = vpop.f32.mrb[0].mxu0
      %v387 = vadd.f32 0.0, %v386
      %v388 = vpop.f32.mrb[0].mxu0
      %389 = vmatprep.mubr.f32.mxu0 0.0
      %390 = vmatmul.mubr.f32.gmra.mrb[0].mxu0 %v228
      %v391 = vpop.f32.mrb[0].mxu0
      %v392 = vadd.f32 0.0, %v391
      %v393 = vpop.f32.mrb[0].mxu0
      %394 = vmatprep.mubr.f32.mxu0 0.0
      %395 = vmatmul.mubr.f32.gmra.mrb[0].mxu0 %v231
      %v396 = vpop.f32.mrb[0].mxu0
      %v397 = vadd.f32 0.0, %v396
      %v398 = vpop.f32.mrb[0].mxu0
      %399 = vmatprep.mubr.f32.mxu0 0.0
      %400 = vmatmul.mubr.f32.gmra.mrb[0].mxu0 %v234
      %v401 = vpop.f32.mrb[0].mxu0
      %v402 = vadd.f32 0.0, %v401
      %v403 = vpop.f32.mrb[0].mxu0
      %404 = vmatprep.mubr.f32.mxu0 0.0
      %405 = vmatmul.mubr.f32.gmra.mrb[0].mxu0 %v237
      %v406 = vpop.f32.mrb[0].mxu0
      %v407 = vadd.f32 0.0, %v406
      %v408 = vpop.f32.mrb[0].mxu0
      %409 = vmatprep.mubr.f32.mxu0 0.0
      %410 = vmatmul.mubr.f32.gmra.mrb[0].mxu0 %v240
      %v411 = vpop.f32.mrb[0].mxu0
      %v412 = vadd.f32 0.0, %v411
      %v413 = vpop.f32.mrb[0].mxu0
      %414 = vmatprep.mubr.f32.mxu0 0.0
      %415 = vmatmul.mubr.f32.gmra.mrb[0].mxu0 %v243
      %v416 = vpop.f32.mrb[0].mxu0
      %v417 = vadd.f32 0.0, %v416
      %v418 = vpop.f32.mrb[0].mxu0
      %419 = vmatprep.mubr.f32.mxu0 0.0
      %420 = vmatmul.mubr.f32.gmra.mrb[0].mxu0 %v246
      %v421 = vpop.f32.mrb[0].mxu0
      %v422 = vadd.f32 0.0, %v421
      %v423 = vpop.f32.mrb[0].mxu0
      %424 = vmatprep.mubr.f32.mxu0 0.0
      %425 = vmatmul.mubr.f32.gmra.mrb[0].mxu0 %v249
      %v426 = vpop.f32.mrb[0].mxu0
      %v427 = vadd.f32 0.0, %v426
      %v428 = vpop.f32.mrb[0].mxu0
      %429 = vmatprep.mubr.f32.mxu0 0.0
      %430 = vmatmul.mubr.f32.gmra.mrb[0].mxu0 %v252
      %v431 = vpop.f32.mrb[0].mxu0
      %v432 = vadd.f32 0.0, %v431
      %v433 = vpop.f32.mrb[0].mxu0
      %434 = vmatprep.mubr.f32.mxu0 0.0
      %435 = vmatmul.mubr.f32.gmra.mrb[0].mxu0 %v255
      %v436 = vpop.f32.mrb[0].mxu0
      %v437 = vadd.f32 0.0, %v436
      %v438 = vpop.f32.mrb[0].mxu0
      %439 = vmatprep.mubr.f32.mxu0 0.0
      %440 = vmatmul.mubr.f32.gmra.mrb[0].mxu0 %v258
      %v441 = vpop.f32.mrb[0].mxu0
      %v442 = vadd.f32 0.0, %v441
      %v443 = vpop.f32.mrb[0].mxu0
      %444 = vmatprep.mubr.f32.mxu0 0.0
      %445 = vmatmul.mubr.f32.gmra.mrb[0].mxu0 %v261
      %v446 = vpop.f32.mrb[0].mxu0
      %v447 = vadd.f32 0.0, %v446
      %v448 = vpop.f32.mrb[0].mxu0
      %449 = vmatprep.mubr.f32.mxu0 0.0
      %450 = vmatmul.mubr.f32.gmra.mrb[0].mxu0 %v264
      %v451 = vpop.f32.mrb[0].mxu0
      %v452 = vadd.f32 0.0, %v451
      %v453 = vpop.f32.mrb[0].mxu0
      %454 = vmatprep.mubr.f32.mxu0 0.0
      %455 = vmatmul.mubr.f32.gmra.mrb[0].mxu0 %v267
      %v456 = vpop.f32.mrb[0].mxu0
      %v457 = vadd.f32 0.0, %v456
      %v458 = vpop.f32.mrb[0].mxu0
      %459 = vmatprep.mubr.f32.mxu0 0.0
      %460 = vmatmul.mubr.f32.gmra.mrb[0].mxu0 %v270
      %v461 = vpop.f32.mrb[0].mxu0
      %v462 = vadd.f32 0.0, %v461
      %v463 = vpop.f32.mrb[0].mxu0
      %464 = vmatprep.mubr.f32.mxu0 0.0
      %465 = vmatmul.mubr.f32.gmra.mrb[0].mxu0 %v273
      %v466 = vpop.f32.mrb[0].mxu0
      %v467 = vadd.f32 0.0, %v466
      %v468 = vpop.f32.mrb[0].mxu0
      %469 = vmatprep.mubr.f32.mxu0 0.0
      %470 = vmatmul.mubr.f32.gmra.mrb[0].mxu0 %v276
      %v471 = vpop.f32.mrb[0].mxu0
      %v472 = vadd.f32 0.0, %v471
      %v473 = vpop.f32.mrb[0].mxu0
      %474 = vmatprep.mubr.f32.mxu0 0.0
      %475 = vmatmul.mubr.f32.gmra.mrb[0].mxu0 %v279
      %v476 = vpop.f32.mrb[0].mxu0
      %v477 = vadd.f32 0.0, %v476
      %v478 = vpop.f32.mrb[0].mxu0
      %479 = vmatprep.mubr.f32.mxu0 0.0
      %480 = vmatmul.mubr.f32.gmra.mrb[0].mxu0 %v282
      %v481 = vpop.f32.mrb[0].mxu0
      %v482 = vadd.f32 0.0, %v481
      %v483 = vpop.f32.mrb[0].mxu0
      %484 = vmatprep.mubr.f32.mxu0 0.0
      %485 = vmatmul.mubr.f32.gmra.mrb[0].mxu0 %v285
      %v486 = vpop.f32.mrb[0].mxu0
      %v487 = vadd.f32 0.0, %v486
      %v488 = vpop.f32.mrb[0].mxu0
      %489 = vmatprep.mubr.f32.mxu0 0.0
      %490 = vmatmul.mubr.f32.gmra.mrb[0].mxu0 %v288
      %v491 = vpop.f32.mrb[0].mxu0
      %v492 = vadd.f32 0.0, %v491
      %v493 = vpop.f32.mrb[0].mxu0
      %494 = vmatprep.mubr.f32.mxu0 0.0
      %495 = vmatmul.mubr.f32.gmra.mrb[0].mxu0 %v291
      %v496 = vpop.f32.mrb[0].mxu0
      %v497 = vadd.f32 0.0, %v496
      %v498 = vpop.f32.mrb[0].mxu0
      %499 = vmatprep.mubr.f32.mxu0 0.0
      %500 = vmatmul.mubr.f32.gmra.mrb[0].mxu0 %v294
      %v501 = vpop.f32.mrb[0].mxu0
      %v502 = vadd.f32 0.0, %v501
      %v503 = vpop.f32.mrb[0].mxu0
      %504 = vmatprep.mubr.f32.mxu0 0.0
      %505 = vmatmul.mubr.f32.gmra.mrb[0].mxu0 %v297
      %v506 = vpop.f32.mrb[0].mxu0
      %v507 = vadd.f32 0.0, %v506
      %v508 = vpop.f32.mrb[0].mxu0
      %509 = vmatprep.mubr.f32.mxu0 0.0
      %510 = vmatmul.mubr.f32.gmra.mrb[0].mxu0 %v300
      %v511 = vpop.f32.mrb[0].mxu0
      %v512 = vadd.f32 0.0, %v511
      %v513 = vpop.f32.mrb[0].mxu0
      %514 = vmatprep.mubr.f32.mxu0 0.0
      %515 = vmatmul.mubr.f32.gmra.mrb[0].mxu0 %v303
      %v516 = vpop.f32.mrb[0].mxu0
      %v517 = vadd.f32 0.0, %v516
      %v518 = vpop.f32.mrb[0].mxu0
      %519 = vmatprep.mubr.f32.mxu0 0.0
      %520 = vmatmul.mubr.f32.gmra.mrb[0].mxu0 %v306
      %v521 = vpop.f32.mrb[0].mxu0
      %v522 = vadd.f32 0.0, %v521
      %v523 = vpop.f32.mrb[0].mxu0
      %524 = vmatprep.mubr.f32.mxu0 0.0
      %525 = vmatmul.mubr.f32.gmra.mrb[0].mxu0 %v309
      %v526 = vpop.f32.mrb[0].mxu0
      %v527 = vadd.f32 0.0, %v526
      %v528 = vpop.f32.mrb[0].mxu0
      %529 = vmatprep.mubr.f32.mxu0 0.0
      %530 = vmatmul.mubr.f32.gmra.mrb[0].mxu0 %v312
      %v531 = vpop.f32.mrb[0].mxu0
      %v532 = vadd.f32 0.0, %v531
      %v533 = vpop.f32.mrb[0].mxu0
      %534 = vmatprep.mubr.f32.mxu0 0.0
      %535 = vmatmul.mubr.f32.gmra.mrb[0].mxu0 %v315
      %v536 = vpop.f32.mrb[0].mxu0
      %v537 = vadd.f32 0.0, %v536
      %v538 = vpop.f32.mrb[0].mxu0
      %539 = vmatprep.mubr.f32.mxu0 0.0
      %540 = vmatmul.mubr.f32.gmra.mrb[0].mxu0 %v318
      %v541 = vpop.f32.mrb[0].mxu0
      %v542 = vadd.f32 0.0, %v541
      %v543 = vpop.f32.mrb[0].mxu0
      %544 = vdwg.mxu0
      %545 = vst.msk [vmem:[%s181] sm:$0xff] %vm223, %v387
      %546 = vst.msk [vmem:[%s181 + $0x8] sm:$0xff] %vm223, %v392
      %547 = vst.msk [vmem:[%s181 + $0x10] sm:$0xff] %vm223, %v397
      %548 = vst.msk [vmem:[%s181 + $0x18] sm:$0xff] %vm223, %v402
      %549 = vst.msk [vmem:[%s181 + $0x20] sm:$0xff] %vm223, %v407
      %550 = vst.msk [vmem:[%s181 + $0x28] sm:$0xff] %vm223, %v412
      %551 = vst.msk [vmem:[%s181 + $0x30] sm:$0xff] %vm223, %v417
      %552 = vst.msk [vmem:[%s181 + $0x38] sm:$0xff] %vm223, %v422
      %553 = vst.msk [vmem:[%s181 + $0x40] sm:$0xff] %vm223, %v427
      %554 = vst.msk [vmem:[%s181 + $0x48] sm:$0xff] %vm223, %v432
      %555 = vst.msk [vmem:[%s181 + $0x50] sm:$0xff] %vm223, %v437
      %556 = vst.msk [vmem:[%s181 + $0x58] sm:$0xff] %vm223, %v442
      %557 = vst.msk [vmem:[%s181 + $0x60] sm:$0xff] %vm223, %v447
      %558 = vst.msk [vmem:[%s181 + $0x68] sm:$0xff] %vm223, %v452
      %559 = vst.msk [vmem:[%s181 + $0x70] sm:$0xff] %vm223, %v457
      %560 = vst.msk [vmem:[%s181 + $0x78] sm:$0xff] %vm223, %v462
      %561 = vst.msk [vmem:[%s181 + $0x80] sm:$0xff] %vm223, %v467
      %562 = vst.msk [vmem:[%s181 + $0x88] sm:$0xff] %vm223, %v472
      %563 = vst.msk [vmem:[%s181 + $0x90] sm:$0xff] %vm223, %v477
      %564 = vst.msk [vmem:[%s181 + $0x98] sm:$0xff] %vm223, %v482
      %565 = vst.msk [vmem:[%s181 + $0xa0] sm:$0xff] %vm223, %v487
      %566 = vst.msk [vmem:[%s181 + $0xa8] sm:$0xff] %vm223, %v492
      %567 = vst.msk [vmem:[%s181 + $0xb0] sm:$0xff] %vm223, %v497
      %568 = vst.msk [vmem:[%s181 + $0xb8] sm:$0xff] %vm223, %v502
      %569 = vst.msk [vmem:[%s181 + $0xc0] sm:$0xff] %vm223, %v507
      %570 = vst.msk [vmem:[%s181 + $0xc8] sm:$0xff] %vm223, %v512
      %571 = vst.msk [vmem:[%s181 + $0xd0] sm:$0xff] %vm223, %v517
      %572 = vst.msk [vmem:[%s181 + $0xd8] sm:$0xff] %vm223, %v522
      %573 = vst.msk [vmem:[%s181 + $0xe0] sm:$0xff] %vm223, %v527
      %574 = vst.msk [vmem:[%s181 + $0xe8] sm:$0xff] %vm223, %v532
      %575 = vst.msk [vmem:[%s181 + $0xf0] sm:$0xff] %vm223, %v537
      %576 = vst.msk [vmem:[%s181 + $0xf8] sm:$0xff] %vm223, %v542
      %s577 = smul.u32 32, %s18
      %p578 = scmp.lt.s32.totalorder %s17, 1
      %s579 = scalar_select %p578, %s17, 1
      %p580 = scmp.lt.s32.totalorder %s577, 31
      %s581 = scalar_select %p580, %s577, 31
      %s582 = smul.addr %s579, 32
      %s583 = sadd.s32 %s581, %s582
      %s584 = smul.addr %s583, 8
      %s585 = scalar_lea.vmem %s2, %s584
      // Predicated region
      $region29: #{tpu_custom_call.1} parent=27 // pred_check
        %p586 = pneg %p94
      $region30: #{tpu_custom_call.1} parent=27 // pred_check_branch
        %588 = sbr.rel (%p586) target = $region32
      $region31: #{tpu_custom_call.1} parent=27 // pred_region
        %s589 = smul.u32 32, %s18
      $region32: #{tpu_custom_call.1} parent=27 // pred_fallthru
        _
    $region28: #{tpu_custom_call.1} parent=5 // pred_fallthru
      _
    %p590 = scmp.le.s32.totalorder 2, %s8
    // Predicated region
    $region33: #{tpu_custom_call.1} parent=5 // pred_check
      %p591 = pneg %p590
    $region34: #{tpu_custom_call.1} parent=5 // pred_check_branch
      %593 = sbr.rel (%p591) target = $region36
    $region35: #{tpu_custom_call.1} parent=5 // pred_region
      %s594 = ssub.s32 %s8, 2
      // Predicated region
      $region37: #{tpu_custom_call.1} parent=35 // pred_check
        %p595 = pneg %p100
      $region38: #{tpu_custom_call.1} parent=35 // pred_check_branch
        %597 = sbr.rel (%p595) target = $region40
      $region39: #{tpu_custom_call.1} parent=35 // pred_region
        %s598 = smul.u32 32, %s20
        %p599 = scmp.lt.s32.totalorder %s19, 1
        %s600 = scalar_select %p599, %s19, 1
        %p601 = scmp.lt.s32.totalorder %s598, 31
        %s602 = scalar_select %p601, %s598, 31
        %s603 = smul.addr %s600, 32
        %s604 = sadd.s32 %s602, %s603
        %s605 = smul.addr %s604, 8
        %s606 = scalar_lea.vmem %s2, %s605
      $region40: #{tpu_custom_call.1} parent=35 // pred_fallthru
        _
    $region36: #{tpu_custom_call.1} parent=5 // pred_fallthru
      _
  $region6: #{tpu_custom_call.1} parent=0 // loop_footer
    %s12 = sadd.s32 1, %s8
  $region7: #{tpu_custom_call.1} parent=0 // loop_footer_branch
    %7 = sbr.rel target = $region3
  $region8: #{tpu_custom_call.1} parent=0 // loop_exit
    _

</llo_original>
